<compile_context>
chip_gen: v5e
topology: v5e:2x2
jax: 0.10.0
libtpu: 0.0.40
codegen_flags: <defaults>
</compile_context>

<pallas_src>
import functools
import math

import jax
import jax.numpy as jnp
from jax import lax
from jax.experimental import pallas as pl
from jax.experimental.pallas import tpu as pltpu

_EPS = 1e-12  # F.normalize default eps


def _encoder_layer_kernel(x_ref, wqkv_ref, bqkv_ref, wo_ref, bo_ref,
                          wfc_ref, bfc_ref, o_ref, *, n_heads):
    Bt, S, D = x_ref.shape
    hd = D // n_heads
    HB = n_heads * Bt
    scale = 1.0 / math.sqrt(hd)
    cdt = x_ref.dtype                     # compute dtype for MXU inputs (bf16)

    x = x_ref[...]                        # (Bt, S, D), compute dtype

    # ---- fused QKV projection, batched over (head, batch) -----------------
    # Only leading-dim broadcasts / merges; last two dims are never touched.
    xb = jnp.broadcast_to(x[None], (n_heads, Bt, S, D)).reshape(HB, S, D)
    wqkv = jnp.broadcast_to(wqkv_ref[...][:, None],
                            (n_heads, Bt, D, 3 * hd)).reshape(HB, D, 3 * hd)
    qkv = jnp.einsum('bsd,bdf->bsf', xb, wqkv,
                     preferred_element_type=jnp.float32)          # (HB,S,3hd)
    qkv = qkv.reshape(n_heads, Bt, S, 3 * hd) + bqkv_ref[...][:, None, None, :]
    qkv = qkv.reshape(HB, S, 3 * hd).astype(cdt)
    q = qkv[..., :hd]
    k = qkv[..., hd:2 * hd]
    v = qkv[..., 2 * hd:]

    # ---- scaled dot-product attention for all (batch, head) pairs ---------
    s = jnp.einsum('bqe,bke->bqk', q, k,
                   preferred_element_type=jnp.float32) * scale    # (HB,S,S)
    s = s - jnp.max(s, axis=-1, keepdims=True)
    p = jnp.exp(s)
    p = p * pl.reciprocal(jnp.sum(p, axis=-1, keepdims=True), approx=True)
    ctx = jnp.einsum('bqk,bke->bqe', p.astype(cdt), v,
                     preferred_element_type=jnp.float32)          # (HB,S,hd)

    # ---- output projection: per-head (S,hd)@(hd,D), summed over heads -----
    wo = jnp.broadcast_to(wo_ref[...][:, None],
                          (n_heads, Bt, hd, D)).reshape(HB, hd, D)
    per_head = jnp.einsum('bqe,bed->bqd', ctx.astype(cdt), wo,
                          preferred_element_type=jnp.float32)     # (HB,S,D)
    per_head = per_head.reshape(n_heads, Bt, S, D)
    attn = per_head[0]
    for h in range(1, n_heads):           # static leading-dim adds (VALU only)
        attn = attn + per_head[h]
    attn = attn + bo_ref[...]                                      # (Bt,S,D)

    # ---- x = F.normalize(x + attn, p=2, dim=-1) ----------------------------
    y = x.astype(jnp.float32) + attn
    y = y * lax.rsqrt(jnp.maximum(jnp.sum(y * y, axis=-1, keepdims=True),
                                  _EPS * _EPS))

    # ---- x = fc(x) ----------------------------------------------------------
    z = jnp.dot(y.reshape(Bt * S, D).astype(cdt), wfc_ref[...],
                preferred_element_type=jnp.float32) + bfc_ref[...]

    # ---- x = F.normalize(z + z)  ==  z * rsqrt(max(sum(z^2), (eps/2)^2)) ----
    out = z * lax.rsqrt(jnp.maximum(jnp.sum(z * z, axis=-1, keepdims=True),
                                    0.25 * _EPS * _EPS))

    o_ref[...] = out.reshape(Bt, S, D).astype(o_ref.dtype)


def transformer_encoder_layer(x, params, n_heads, *, batch_block=None,
                              compute_dtype=jnp.bfloat16):
    """x: (B, S, D).  params: nn.Linear weights pre-transposed to (in, out)."""
    B, S, D = x.shape
    assert D % n_heads == 0
    hd = D // n_heads
    Bt = B if batch_block is None else batch_block
    assert B % Bt == 0

    # ---- host-side weight packing (per-head blocking, done once) ----------
    def head_cols(w):                        # (D, D) -> (H, D, hd)
        return jnp.transpose(w.reshape(D, n_heads, hd), (1, 0, 2))

    wqkv_heads = jnp.concatenate(
        [head_cols(params["wq"]), head_cols(params["wk"]),
         head_cols(params["wv"])], axis=-1).astype(compute_dtype)   # (H,D,3hd)
    bqkv_heads = jnp.concatenate(
        [params["bq"].reshape(n_heads, hd),
         params["bk"].reshape(n_heads, hd),
         params["bv"].reshape(n_heads, hd)], axis=-1).astype(jnp.float32)
    wo_heads = params["wo"].reshape(n_heads, hd, D).astype(compute_dtype)
    bo = params["bo"].reshape(1, D).astype(jnp.float32)
    wfc = params["wfc"].astype(compute_dtype)
    bfc = params["bfc"].reshape(1, D).astype(jnp.float32)
    x_c = x.astype(compute_dtype)

    kernel = functools.partial(_encoder_layer_kernel, n_heads=n_heads)

    flops = (2 * B * S * D * (3 * D)          # fused QKV projection
             + 4 * B * n_heads * S * S * hd   # QK^T and PV
             + 4 * B * S * D * D)             # output projection + fc
    transcendentals = B * n_heads * S * S + B * n_heads * S + 2 * B * S
    bytes_accessed = sum(int(a.size) * a.dtype.itemsize for a in
                         (x_c, wqkv_heads, bqkv_heads, wo_heads, bo, wfc, bfc))
    bytes_accessed += B * S * D * x.dtype.itemsize          # output

    const3 = lambda i: (0, 0, 0)
    const2 = lambda i: (0, 0)

    return pl.pallas_call(
        kernel,
        out_shape=jax.ShapeDtypeStruct((B, S, D), x.dtype),
        grid=(B // Bt,),
        in_specs=[
            pl.BlockSpec((Bt, S, D), lambda i: (i, 0, 0)),        # x
            pl.BlockSpec((n_heads, D, 3 * hd), const3),           # Wqkv (heads)
            pl.BlockSpec((n_heads, 3 * hd), const2),              # bqkv (heads)
            pl.BlockSpec((n_heads, hd, D), const3),               # Wo   (heads)
            pl.BlockSpec((1, D), const2),                         # bo
            pl.BlockSpec((D, D), const2),                         # Wfc
            pl.BlockSpec((1, D), const2),                         # bfc
        ],
        out_specs=pl.BlockSpec((Bt, S, D), lambda i: (i, 0, 0)),
        compiler_params=pltpu.CompilerParams(
            dimension_semantics=("parallel",)),
        cost_estimate=pl.CostEstimate(flops=flops,
                                      transcendentals=transcendentals,
                                      bytes_accessed=bytes_accessed),
    )(x_c, wqkv_heads, bqkv_heads, wo_heads, bo, wfc, bfc)


if __name__ == "__main__":
    B, S, D, H = 2, 8, 32, 4          # batch, seq_len, d_model, n_heads
    key = jax.random.PRNGKey(0)
    ks = jax.random.split(key, 11)

    def init(k, shape, scale=0.02):
        return jax.random.normal(k, shape, jnp.float32) * scale

    # nn.Linear weights are (out, in) in torch; here stored transposed (in, out).
    params = {
        "wq": init(ks[0], (D, D)),  "bq": init(ks[1], (1, D)),
        "wk": init(ks[2], (D, D)),  "bk": init(ks[3], (1, D)),
        "wv": init(ks[4], (D, D)),  "bv": init(ks[5], (1, D)),
        "wo": init(ks[6], (D, D)),  "bo": init(ks[7], (1, D)),
        "wfc": init(ks[8], (D, D)), "bfc": init(ks[9], (1, D)),
    }
    x = jax.random.normal(ks[10], (B, S, D), jnp.float32)

    out = transformer_encoder_layer(x, params, n_heads=H)
    out = jax.block_until_ready(out)
    assert out.shape == (B, S, D)
    assert bool(jnp.all(jnp.isfinite(out)))
    print("KERNEL_OK")
</pallas_src>

<mosaic_0001>
module attributes {stable_mosaic.version = 11 : i64} {
  func.func @_encoder_layer_kernel(%arg0: i32, %arg1: memref<2x8x32xbf16, #tpu.memory_space<vmem>>, %arg2: memref<4x32x24xbf16, #tpu.memory_space<vmem>>, %arg3: memref<4x24xf32, #tpu.memory_space<vmem>>, %arg4: memref<4x8x32xbf16, #tpu.memory_space<vmem>>, %arg5: memref<1x32xf32, #tpu.memory_space<vmem>>, %arg6: memref<32x32xbf16, #tpu.memory_space<vmem>>, %arg7: memref<1x32xf32, #tpu.memory_space<vmem>>, %arg8: memref<2x8x32xf32, #tpu.memory_space<vmem>>) attributes {dimension_semantics = [#tpu.dimension_semantics<parallel>], iteration_bounds = array<i64: 1>, scalar_prefetch = 0 : i64, scratch_operands = 0 : i64, tpu.core_type = #tpu.core_type<tc>, window_params = [{transform_indices = @transform_0, window_bounds = array<i64: 2, 8, 32>}, {pipeline_mode = #tpu.pipeline_mode<synchronous>, transform_indices = @transform_1, window_bounds = array<i64: 4, 32, 24>}, {pipeline_mode = #tpu.pipeline_mode<synchronous>, transform_indices = @transform_2, window_bounds = array<i64: 4, 24>}, {pipeline_mode = #tpu.pipeline_mode<synchronous>, transform_indices = @transform_3, window_bounds = array<i64: 4, 8, 32>}, {pipeline_mode = #tpu.pipeline_mode<synchronous>, transform_indices = @transform_4, window_bounds = array<i64: 1, 32>}, {pipeline_mode = #tpu.pipeline_mode<synchronous>, transform_indices = @transform_5, window_bounds = array<i64: 32, 32>}, {pipeline_mode = #tpu.pipeline_mode<synchronous>, transform_indices = @transform_6, window_bounds = array<i64: 1, 32>}, {transform_indices = @transform_7, window_bounds = array<i64: 2, 8, 32>}]} {
    %c0 = arith.constant 0 : index
    %c0_0 = arith.constant 0 : index
    %c0_1 = arith.constant 0 : index
    %0 = vector.load %arg1[%c0, %c0_0, %c0_1] : memref<2x8x32xbf16, #tpu.memory_space<vmem>>, vector<2x8x32xbf16>
    %1 = vector.shape_cast %0 : vector<2x8x32xbf16> to vector<1x2x8x32xbf16>
    %2 = vector.shape_cast %1 : vector<1x2x8x32xbf16> to vector<1x2x8x32xbf16>
    %3 = vector.broadcast %2 : vector<1x2x8x32xbf16> to vector<4x2x8x32xbf16>
    %4 = vector.shape_cast %3 : vector<4x2x8x32xbf16> to vector<8x8x32xbf16>
    %c0_2 = arith.constant 0 : index
    %c0_3 = arith.constant 0 : index
    %c0_4 = arith.constant 0 : index
    %5 = vector.load %arg2[%c0_2, %c0_3, %c0_4] : memref<4x32x24xbf16, #tpu.memory_space<vmem>>, vector<4x32x24xbf16>
    %6 = vector.shape_cast %5 : vector<4x32x24xbf16> to vector<4x1x32x24xbf16>
    %7 = vector.shape_cast %6 : vector<4x1x32x24xbf16> to vector<4x1x32x24xbf16>
    %8 = vector.broadcast %7 : vector<4x1x32x24xbf16> to vector<4x2x32x24xbf16>
    %9 = vector.shape_cast %8 : vector<4x2x32x24xbf16> to vector<8x32x24xbf16>
    "tpu.trace_start"() <{level = 10 : i32, message = "bsd,bdf->bsf"}> : () -> ()
    %cst = arith.constant dense<0.000000e+00> : vector<8x8x24xf32>
    %10 = tpu.matmul %4, %9, %cst {dimension_numbers = #tpu.dot_dimension_numbers<[2], [1], [1], [2], [0, 0, 0, 1, 1, 2], [0], [0]>} : vector<8x8x32xbf16>, vector<8x32x24xbf16>, vector<8x8x24xf32> -> vector<8x8x24xf32>
    "tpu.trace_stop"() : () -> ()
    %11 = vector.shape_cast %10 : vector<8x8x24xf32> to vector<4x2x8x24xf32>
    %c0_5 = arith.constant 0 : index
    %c0_6 = arith.constant 0 : index
    %12 = vector.load %arg3[%c0_5, %c0_6] : memref<4x24xf32, #tpu.memory_space<vmem>>, vector<4x24xf32>
    %13 = vector.shape_cast %12 : vector<4x24xf32> to vector<4x1x1x24xf32>
    %14 = vector.broadcast %13 : vector<4x1x1x24xf32> to vector<4x2x8x24xf32>
    %15 = arith.addf %11, %14 : vector<4x2x8x24xf32>
    %16 = vector.shape_cast %15 : vector<4x2x8x24xf32> to vector<8x8x24xf32>
    %17 = arith.truncf %16 : vector<8x8x24xf32> to vector<8x8x24xbf16>
    %18 = vector.extract_strided_slice %17 {offsets = [0, 0, 0], sizes = [8, 8, 8], strides = [1, 1, 1]} : vector<8x8x24xbf16> to vector<8x8x8xbf16>
    %19 = vector.extract_strided_slice %17 {offsets = [0, 0, 8], sizes = [8, 8, 8], strides = [1, 1, 1]} : vector<8x8x24xbf16> to vector<8x8x8xbf16>
    %20 = vector.extract_strided_slice %17 {offsets = [0, 0, 16], sizes = [8, 8, 8], strides = [1, 1, 1]} : vector<8x8x24xbf16> to vector<8x8x8xbf16>
    "tpu.trace_start"() <{level = 10 : i32, message = "bqe,bke->bqk"}> : () -> ()
    %cst_7 = arith.constant dense<0.000000e+00> : vector<8x8x8xf32>
    %21 = tpu.matmul %18, %19, %cst_7 {dimension_numbers = #tpu.dot_dimension_numbers<[2], [2], [1], [1], [0, 0, 0, 1, 1, 1], [0], [0]>} : vector<8x8x8xbf16>, vector<8x8x8xbf16>, vector<8x8x8xf32> -> vector<8x8x8xf32>
    "tpu.trace_stop"() : () -> ()
    %cst_8 = arith.constant 0.353553385 : f32
    %22 = vector.broadcast %cst_8 : f32 to vector<8x8x8xf32>
    %23 = arith.mulf %21, %22 : vector<8x8x8xf32>
    %cst_9 = arith.constant dense<0xFF800000> : vector<8x8xf32>
    %24 = vector.multi_reduction <maximumf>, %23, %cst_9 [2] : vector<8x8x8xf32> to vector<8x8xf32>
    %25 = vector.shape_cast %24 : vector<8x8xf32> to vector<8x8x1xf32>
    %26 = vector.broadcast %25 : vector<8x8x1xf32> to vector<8x8x8xf32>
    %27 = arith.subf %23, %26 : vector<8x8x8xf32>
    %28 = math.exp %27 : vector<8x8x8xf32>
    %cst_10 = arith.constant dense<0.000000e+00> : vector<8x8xf32>
    %29 = vector.multi_reduction <add>, %28, %cst_10 [2] : vector<8x8x8xf32> to vector<8x8xf32>
    %30 = vector.shape_cast %29 : vector<8x8xf32> to vector<8x8x1xf32>
    %31 = tpu.reciprocal %30 {approx = true} : vector<8x8x1xf32> -> vector<8x8x1xf32>
    %32 = vector.broadcast %31 : vector<8x8x1xf32> to vector<8x8x8xf32>
    %33 = arith.mulf %28, %32 : vector<8x8x8xf32>
    %34 = arith.truncf %33 : vector<8x8x8xf32> to vector<8x8x8xbf16>
    "tpu.trace_start"() <{level = 10 : i32, message = "bqk,bke->bqe"}> : () -> ()
    %cst_11 = arith.constant dense<0.000000e+00> : vector<8x8x8xf32>
    %35 = tpu.matmul %34, %20, %cst_11 {dimension_numbers = #tpu.dot_dimension_numbers<[2], [1], [1], [2], [0, 0, 0, 1, 1, 2], [0], [0]>} : vector<8x8x8xbf16>, vector<8x8x8xbf16>, vector<8x8x8xf32> -> vector<8x8x8xf32>
    "tpu.trace_stop"() : () -> ()
    %c0_12 = arith.constant 0 : index
    %c0_13 = arith.constant 0 : index
    %c0_14 = arith.constant 0 : index
    %36 = vector.load %arg4[%c0_12, %c0_13, %c0_14] : memref<4x8x32xbf16, #tpu.memory_space<vmem>>, vector<4x8x32xbf16>
    %37 = vector.shape_cast %36 : vector<4x8x32xbf16> to vector<4x1x8x32xbf16>
    %38 = vector.shape_cast %37 : vector<4x1x8x32xbf16> to vector<4x1x8x32xbf16>
    %39 = vector.broadcast %38 : vector<4x1x8x32xbf16> to vector<4x2x8x32xbf16>
    %40 = vector.shape_cast %39 : vector<4x2x8x32xbf16> to vector<8x8x32xbf16>
    %41 = arith.truncf %35 : vector<8x8x8xf32> to vector<8x8x8xbf16>
    "tpu.trace_start"() <{level = 10 : i32, message = "bqe,bed->bqd"}> : () -> ()
    %cst_15 = arith.constant dense<0.000000e+00> : vector<8x8x32xf32>
    %42 = tpu.matmul %41, %40, %cst_15 {dimension_numbers = #tpu.dot_dimension_numbers<[2], [1], [1], [2], [0, 0, 0, 1, 1, 2], [0], [0]>} : vector<8x8x8xbf16>, vector<8x8x32xbf16>, vector<8x8x32xf32> -> vector<8x8x32xf32>
    "tpu.trace_stop"() : () -> ()
    %43 = vector.shape_cast %42 : vector<8x8x32xf32> to vector<4x2x8x32xf32>
    %44 = vector.extract_strided_slice %43 {offsets = [0, 0, 0, 0], sizes = [1, 2, 8, 32], strides = [1, 1, 1, 1]} : vector<4x2x8x32xf32> to vector<1x2x8x32xf32>
    %45 = vector.shape_cast %44 : vector<1x2x8x32xf32> to vector<2x8x32xf32>
    %46 = vector.extract_strided_slice %43 {offsets = [1, 0, 0, 0], sizes = [1, 2, 8, 32], strides = [1, 1, 1, 1]} : vector<4x2x8x32xf32> to vector<1x2x8x32xf32>
    %47 = vector.shape_cast %46 : vector<1x2x8x32xf32> to vector<2x8x32xf32>
    %48 = arith.addf %45, %47 : vector<2x8x32xf32>
    %49 = vector.extract_strided_slice %43 {offsets = [2, 0, 0, 0], sizes = [1, 2, 8, 32], strides = [1, 1, 1, 1]} : vector<4x2x8x32xf32> to vector<1x2x8x32xf32>
    %50 = vector.shape_cast %49 : vector<1x2x8x32xf32> to vector<2x8x32xf32>
    %51 = arith.addf %48, %50 : vector<2x8x32xf32>
    %52 = vector.extract_strided_slice %43 {offsets = [3, 0, 0, 0], sizes = [1, 2, 8, 32], strides = [1, 1, 1, 1]} : vector<4x2x8x32xf32> to vector<1x2x8x32xf32>
    %53 = vector.shape_cast %52 : vector<1x2x8x32xf32> to vector<2x8x32xf32>
    %54 = arith.addf %51, %53 : vector<2x8x32xf32>
    %c0_16 = arith.constant 0 : index
    %c0_17 = arith.constant 0 : index
    %55 = vector.load %arg5[%c0_16, %c0_17] : memref<1x32xf32, #tpu.memory_space<vmem>>, vector<1x32xf32>
    %56 = vector.shape_cast %55 : vector<1x32xf32> to vector<1x1x32xf32>
    %57 = vector.broadcast %56 : vector<1x1x32xf32> to vector<2x8x32xf32>
    %58 = arith.addf %54, %57 : vector<2x8x32xf32>
    %59 = arith.extf %0 : vector<2x8x32xbf16> to vector<2x8x32xf32>
    %60 = arith.addf %59, %58 : vector<2x8x32xf32>
    %61 = arith.mulf %60, %60 : vector<2x8x32xf32>
    %cst_18 = arith.constant dense<0.000000e+00> : vector<2x8xf32>
    %62 = vector.multi_reduction <add>, %61, %cst_18 [2] : vector<2x8x32xf32> to vector<2x8xf32>
    %63 = vector.shape_cast %62 : vector<2x8xf32> to vector<2x8x1xf32>
    %cst_19 = arith.constant 1.000000e-24 : f32
    %64 = vector.broadcast %cst_19 : f32 to vector<2x8x1xf32>
    %65 = arith.maximumf %63, %64 : vector<2x8x1xf32>
    %66 = math.rsqrt %65 : vector<2x8x1xf32>
    %67 = vector.broadcast %66 : vector<2x8x1xf32> to vector<2x8x32xf32>
    %68 = arith.mulf %60, %67 : vector<2x8x32xf32>
    %69 = vector.shape_cast %68 : vector<2x8x32xf32> to vector<16x32xf32>
    %70 = arith.truncf %69 : vector<16x32xf32> to vector<16x32xbf16>
    %c0_20 = arith.constant 0 : index
    %c0_21 = arith.constant 0 : index
    %71 = vector.load %arg6[%c0_20, %c0_21] : memref<32x32xbf16, #tpu.memory_space<vmem>>, vector<32x32xbf16>
    %cst_22 = arith.constant dense<0.000000e+00> : vector<16x32xf32>
    %72 = tpu.matmul %70, %71, %cst_22 {dimension_numbers = #tpu.dot_dimension_numbers<[1], [0], [0], [1], [0, 0, 1, 1], [], []>} : vector<16x32xbf16>, vector<32x32xbf16>, vector<16x32xf32> -> vector<16x32xf32>
    %c0_23 = arith.constant 0 : index
    %c0_24 = arith.constant 0 : index
    %73 = vector.load %arg7[%c0_23, %c0_24] : memref<1x32xf32, #tpu.memory_space<vmem>>, vector<1x32xf32>
    %74 = vector.broadcast %73 : vector<1x32xf32> to vector<16x32xf32>
    %75 = arith.addf %72, %74 : vector<16x32xf32>
    %76 = arith.mulf %75, %75 : vector<16x32xf32>
    %cst_25 = arith.constant dense<0.000000e+00> : vector<16xf32>
    %77 = vector.multi_reduction <add>, %76, %cst_25 [1] : vector<16x32xf32> to vector<16xf32>
    %78 = vector.shape_cast %77 : vector<16xf32> to vector<16x1xf32>
    %cst_26 = arith.constant 2.500000e-25 : f32
    %79 = vector.broadcast %cst_26 : f32 to vector<16x1xf32>
    %80 = arith.maximumf %78, %79 : vector<16x1xf32>
    %81 = math.rsqrt %80 : vector<16x1xf32>
    %82 = vector.broadcast %81 : vector<16x1xf32> to vector<16x32xf32>
    %83 = arith.mulf %75, %82 : vector<16x32xf32>
    %84 = vector.shape_cast %83 : vector<16x32xf32> to vector<2x8x32xf32>
    %c0_27 = arith.constant 0 : index
    %c0_28 = arith.constant 0 : index
    %c0_29 = arith.constant 0 : index
    %85 = vector.load %arg8[%c0_27, %c0_28, %c0_29] : memref<2x8x32xf32, #tpu.memory_space<vmem>>, vector<2x8x32xf32>
    tpu.vector_store %arg8[%c0_27, %c0_28, %c0_29], %84 {strides = array<i32>} : memref<2x8x32xf32, #tpu.memory_space<vmem>>, vector<2x8x32xf32>,
    return
  }
  func.func @transform_0(%arg0: i32) -> (i32, i32, i32) {
    %c0_i32 = arith.constant 0 : i32
    %c0_i32_0 = arith.constant 0 : i32
    %c0_i32_1 = arith.constant 0 : i32
    return %arg0, %c0_i32, %c0_i32_0 : i32, i32, i32
  }
  func.func @transform_1(%arg0: i32) -> (i32, i32, i32) {
    %c0_i32 = arith.constant 0 : i32
    %c0_i32_0 = arith.constant 0 : i32
    %c0_i32_1 = arith.constant 0 : i32
    %c0_i32_2 = arith.constant 0 : i32
    return %c0_i32, %c0_i32_0, %c0_i32_1 : i32, i32, i32
  }
  func.func @transform_2(%arg0: i32) -> (i32, i32) {
    %c0_i32 = arith.constant 0 : i32
    %c0_i32_0 = arith.constant 0 : i32
    %c0_i32_1 = arith.constant 0 : i32
    return %c0_i32, %c0_i32_0 : i32, i32
  }
  func.func @transform_3(%arg0: i32) -> (i32, i32, i32) {
    %c0_i32 = arith.constant 0 : i32
    %c0_i32_0 = arith.constant 0 : i32
    %c0_i32_1 = arith.constant 0 : i32
    %c0_i32_2 = arith.constant 0 : i32
    return %c0_i32, %c0_i32_0, %c0_i32_1 : i32, i32, i32
  }
  func.func @transform_4(%arg0: i32) -> (i32, i32) {
    %c0_i32 = arith.constant 0 : i32
    %c0_i32_0 = arith.constant 0 : i32
    %c0_i32_1 = arith.constant 0 : i32
    return %c0_i32, %c0_i32_0 : i32, i32
  }
  func.func @transform_5(%arg0: i32) -> (i32, i32) {
    %c0_i32 = arith.constant 0 : i32
    %c0_i32_0 = arith.constant 0 : i32
    %c0_i32_1 = arith.constant 0 : i32
    return %c0_i32, %c0_i32_0 : i32, i32
  }
  func.func @transform_6(%arg0: i32) -> (i32, i32) {
    %c0_i32 = arith.constant 0 : i32
    %c0_i32_0 = arith.constant 0 : i32
    %c0_i32_1 = arith.constant 0 : i32
    return %c0_i32, %c0_i32_0 : i32, i32
  }
  func.func @transform_7(%arg0: i32) -> (i32, i32, i32) {
    %c0_i32 = arith.constant 0 : i32
    %c0_i32_0 = arith.constant 0 : i32
    %c0_i32_1 = arith.constant 0 : i32
    return %arg0, %c0_i32, %c0_i32_0 : i32, i32, i32
  }
}

</mosaic_0001>

<llo_original>
// kernel: tpu_custom_call.1
$region0: #{tpu_custom_call.1}
  #allocation0 [shape = 'u32[]', space=smem, size = 0x4, offset = 0x4, fixed_abs, tag = 'smem constant byte address 0x4 - core index']
  #allocation1 [shape = 'u32[72,128]{1,0:T(1,128)}', space=vmem, size = 0x9000, scoped, tag = 'internal scratch']
  %s0 = inlined_call_operand.vmem [shape: bf16[2,8,32], index: 0, kind: input, shape index: {}]
  %s1 = inlined_call_operand.vmem [shape: bf16[4,32,24], index: 1, kind: input, shape index: {}]
  %s2 = inlined_call_operand.vmem [shape: f32[4,24], index: 2, kind: input, shape index: {}]
  %s3 = inlined_call_operand.vmem [shape: bf16[4,8,32], index: 3, kind: input, shape index: {}]
  %s4 = inlined_call_operand.vmem [shape: f32[1,32], index: 4, kind: input, shape index: {}]
  %s5 = inlined_call_operand.vmem [shape: bf16[32,32], index: 5, kind: input, shape index: {}]
  %s6 = inlined_call_operand.vmem [shape: f32[1,32], index: 6, kind: input, shape index: {}]
  %s7 = inlined_call_operand.hbm [shape: f32[2,8,32], index: 7, kind: output, shape index: {}]
  %s8 = sld [smem:[#allocation0]]
  $region38: #{tpu_custom_call.1} parent=0
    _
  %s10 = ssub.s32 1, %s8
  %s11 = scalar_select 0, %s10, %s8
  $region1: #{tpu_custom_call.1} parent=0
    #allocation2 [shape = 'u8[8192]{0}', space=vmem, size = 0x2000, scoped, tag = 'output window, operand 0, single buffered']
    #allocation3 [shape = 's32[1]{0}', space=sflag, size = 0x4, scoped, tag = 'scoped memory for tpu_custom_call.1']
    %12 = vsyncpa [#allocation3], 0
    // Predicated region
    $region2: #{tpu_custom_call.1} parent=1 // pred_check
      _
    $region3: #{tpu_custom_call.1} parent=1 // pred_check_branch
      %14 = sbr.rel (0) target = $region5
    $region4: #{tpu_custom_call.1} parent=1 // pred_region
      _
    $region5: #{tpu_custom_call.1} parent=1 // pred_fallthru
      _
    // Predicated region
    $region6: #{tpu_custom_call.1} parent=1 // pred_check
      _
    $region7: #{tpu_custom_call.1} parent=1 // pred_check_branch
      %16 = sbr.rel (0) target = $region9
    $region8: #{tpu_custom_call.1} parent=1 // pred_region
      _
    $region9: #{tpu_custom_call.1} parent=1 // pred_fallthru
      _
    // Predicated region
    $region10: #{tpu_custom_call.1} parent=1 // pred_check
      _
    $region11: #{tpu_custom_call.1} parent=1 // pred_check_branch
      %18 = sbr.rel (0) target = $region13
    $region12: #{tpu_custom_call.1} parent=1 // pred_region
      _
    $region13: #{tpu_custom_call.1} parent=1 // pred_fallthru
      _
    // Predicated region
    $region14: #{tpu_custom_call.1} parent=1 // pred_check
      _
    $region15: #{tpu_custom_call.1} parent=1 // pred_check_branch
      %20 = sbr.rel (0) target = $region17
    $region16: #{tpu_custom_call.1} parent=1 // pred_region
      _
    $region17: #{tpu_custom_call.1} parent=1 // pred_fallthru
      _
    // Predicated region
    $region18: #{tpu_custom_call.1} parent=1 // pred_check
      _
    $region19: #{tpu_custom_call.1} parent=1 // pred_check_branch
      %22 = sbr.rel (0) target = $region21
    $region20: #{tpu_custom_call.1} parent=1 // pred_region
      _
    $region21: #{tpu_custom_call.1} parent=1 // pred_fallthru
      _
    // Predicated region
    $region22: #{tpu_custom_call.1} parent=1 // pred_check
      _
    $region23: #{tpu_custom_call.1} parent=1 // pred_check_branch
      %24 = sbr.rel (0) target = $region25
    $region24: #{tpu_custom_call.1} parent=1 // pred_region
      _
    $region25: #{tpu_custom_call.1} parent=1 // pred_fallthru
      _
    // Predicated region
    $region26: #{tpu_custom_call.1} parent=1 // pred_check
      _
    $region27: #{tpu_custom_call.1} parent=1 // pred_check_branch
      %26 = sbr.rel (0) target = $region29
    $region28: #{tpu_custom_call.1} parent=1 // pred_region
      _
    $region29: #{tpu_custom_call.1} parent=1 // pred_fallthru
      _
    %v28 = vld [vmem:[%s0] sm:$0xf]
    %v29 = vld [vmem:[%s0 + $0x4] sm:$0xf]
    %v30 = vld [vmem:[%s1] sm:$0xf]
    %v31 = vld [vmem:[%s1 + $0x4] sm:$0xf]
    %v32 = vld [vmem:[%s1 + $0x8] sm:$0xf]
    %v33 = vld [vmem:[%s1 + $0xc] sm:$0xf]
    %v34 = vld [vmem:[%s1 + $0x10] sm:$0xf]
    %v35 = vld [vmem:[%s1 + $0x14] sm:$0xf]
    %v36 = vld [vmem:[%s1 + $0x18] sm:$0xf]
    %v37 = vld [vmem:[%s1 + $0x1c] sm:$0xf]
    %v38 = vld [vmem:[%s1 + $0x20] sm:$0xf]
    %v39 = vld [vmem:[%s1 + $0x24] sm:$0xf]
    %v40 = vld [vmem:[%s1 + $0x28] sm:$0xf]
    %v41 = vld [vmem:[%s1 + $0x2c] sm:$0xf]
    %v42 = vld [vmem:[%s1 + $0x30] sm:$0xf]
    %v43 = vld [vmem:[%s1 + $0x34] sm:$0xf]
    %v44 = vld [vmem:[%s1 + $0x38] sm:$0xf]
    %v45 = vld [vmem:[%s1 + $0x3c] sm:$0xf]
    %v50 = vunpack.c.l.b16 %v30
    %v51 = vunpack.c.l.b16 %v31
    %v52 = vunpack.c.l.b16 %v32
    %v53 = vunpack.c.l.b16 %v33
    %v54 = vpack.c.b16 %v51, %v50
    %v55 = vpack.c.b16 %v53, %v52
    %vm58 = vcmask 261120
    %v60 = vsel %vm58, %v28, 0
    %62 = vmatpush.bf16.msra.mxu0 0
    %63 = vmatpush.bf16.msra.mxu0 0
    %64 = vmatpush.bf16.msra.mxu0 0
    %65 = vmatpush.bf16.msra.mxu0 0
    %66 = vmatpush.bf16.msra.mxu0 0
    %67 = vmatpush.bf16.msra.mxu0 0
    %68 = vmatpush.bf16.msra.mxu0 %v55
    %69 = vmatpush.bf16.msra.mxu0 %v54
    %70 = vmatmul.bf16.gmra.mxu0 %v60
    %v71 = vpop.f32.mrf.mxu0
    %v72 = vadd.f32 0.0, %v71
    %v73 = vpop.f32.mrf.mxu0
    %74 = vdwg.mxu0
    %v76 = vsel %vm58, %v29, 0
    %78 = vmatpush.bf16.msra.mxu0 0
    %79 = vmatpush.bf16.msra.mxu0 0
    %80 = vmatpush.bf16.msra.mxu0 0
    %81 = vmatpush.bf16.msra.mxu0 0
    %82 = vmatpush.bf16.msra.mxu0 0
    %83 = vmatpush.bf16.msra.mxu0 0
    %84 = vmatpush.bf16.msra.mxu0 %v55
    %85 = vmatpush.bf16.msra.mxu0 %v54
    %86 = vmatmul.bf16.gmra.mxu0 %v76
    %v87 = vpop.f32.mrf.mxu0
    %v88 = vadd.f32 0.0, %v87
    %v89 = vpop.f32.mrf.mxu0
    %90 = vdwg.mxu0
    %v95 = vunpack.c.l.b16 %v34
    %v96 = vunpack.c.l.b16 %v35
    %v97 = vunpack.c.l.b16 %v36
    %v98 = vunpack.c.l.b16 %v37
    %v99 = vpack.c.b16 %v96, %v95
    %v100 = vpack.c.b16 %v98, %v97
    %103 = vmatpush.bf16.msra.mxu0 0
    %104 = vmatpush.bf16.msra.mxu0 0
    %105 = vmatpush.bf16.msra.mxu0 0
    %106 = vmatpush.bf16.msra.mxu0 0
    %107 = vmatpush.bf16.msra.mxu0 0
    %108 = vmatpush.bf16.msra.mxu0 0
    %109 = vmatpush.bf16.msra.mxu0 %v100
    %110 = vmatpush.bf16.msra.mxu0 %v99
    %111 = vmatmul.bf16.gmra.mxu0 %v60
    %v112 = vpop.f32.mrf.mxu0
    %v113 = vadd.f32 0.0, %v112
    %v114 = vpop.f32.mrf.mxu0
    %115 = vdwg.mxu0
    %116 = vmatpush.bf16.msra.mxu0 0
    %117 = vmatpush.bf16.msra.mxu0 0
    %118 = vmatpush.bf16.msra.mxu0 0
    %119 = vmatpush.bf16.msra.mxu0 0
    %120 = vmatpush.bf16.msra.mxu0 0
    %121 = vmatpush.bf16.msra.mxu0 0
    %122 = vmatpush.bf16.msra.mxu0 %v100
    %123 = vmatpush.bf16.msra.mxu0 %v99
    %124 = vmatmul.bf16.gmra.mxu0 %v76
    %v125 = vpop.f32.mrf.mxu0
    %v126 = vadd.f32 0.0, %v125
    %v127 = vpop.f32.mrf.mxu0
    %128 = vdwg.mxu0
    %v133 = vunpack.c.l.b16 %v38
    %v134 = vunpack.c.l.b16 %v39
    %v135 = vunpack.c.l.b16 %v40
    %v136 = vunpack.c.l.b16 %v41
    %v137 = vpack.c.b16 %v134, %v133
    %v138 = vpack.c.b16 %v136, %v135
    %141 = vmatpush.bf16.msra.mxu0 0
    %142 = vmatpush.bf16.msra.mxu0 0
    %143 = vmatpush.bf16.msra.mxu0 0
    %144 = vmatpush.bf16.msra.mxu0 0
    %145 = vmatpush.bf16.msra.mxu0 0
    %146 = vmatpush.bf16.msra.mxu0 0
    %147 = vmatpush.bf16.msra.mxu0 %v138
    %148 = vmatpush.bf16.msra.mxu0 %v137
    %149 = vmatmul.bf16.gmra.mxu0 %v60
    %v150 = vpop.f32.mrf.mxu0
    %v151 = vadd.f32 0.0, %v150
    %v152 = vpop.f32.mrf.mxu0
    %153 = vdwg.mxu0
    %154 = vmatpush.bf16.msra.mxu0 0
    %155 = vmatpush.bf16.msra.mxu0 0
    %156 = vmatpush.bf16.msra.mxu0 0
    %157 = vmatpush.bf16.msra.mxu0 0
    %158 = vmatpush.bf16.msra.mxu0 0
    %159 = vmatpush.bf16.msra.mxu0 0
    %160 = vmatpush.bf16.msra.mxu0 %v138
    %161 = vmatpush.bf16.msra.mxu0 %v137
    %162 = vmatmul.bf16.gmra.mxu0 %v76
    %v163 = vpop.f32.mrf.mxu0
    %v164 = vadd.f32 0.0, %v163
    %v165 = vpop.f32.mrf.mxu0
    %166 = vdwg.mxu0
    %v171 = vunpack.c.l.b16 %v42
    %v172 = vunpack.c.l.b16 %v43
    %v173 = vunpack.c.l.b16 %v44
    %v174 = vunpack.c.l.b16 %v45
    %v175 = vpack.c.b16 %v172, %v171
    %v176 = vpack.c.b16 %v174, %v173
    %179 = vmatpush.bf16.msra.mxu0 0
    %180 = vmatpush.bf16.msra.mxu0 0
    %181 = vmatpush.bf16.msra.mxu0 0
    %182 = vmatpush.bf16.msra.mxu0 0
    %183 = vmatpush.bf16.msra.mxu0 0
    %184 = vmatpush.bf16.msra.mxu0 0
    %185 = vmatpush.bf16.msra.mxu0 %v176
    %186 = vmatpush.bf16.msra.mxu0 %v175
    %187 = vmatmul.bf16.gmra.mxu0 %v60
    %v188 = vpop.f32.mrf.mxu0
    %v189 = vadd.f32 0.0, %v188
    %v190 = vpop.f32.mrf.mxu0
    %191 = vdwg.mxu0
    %192 = vmatpush.bf16.msra.mxu0 0
    %193 = vmatpush.bf16.msra.mxu0 0
    %194 = vmatpush.bf16.msra.mxu0 0
    %195 = vmatpush.bf16.msra.mxu0 0
    %196 = vmatpush.bf16.msra.mxu0 0
    %197 = vmatpush.bf16.msra.mxu0 0
    %198 = vmatpush.bf16.msra.mxu0 %v176
    %199 = vmatpush.bf16.msra.mxu0 %v175
    %200 = vmatmul.bf16.gmra.mxu0 %v76
    %v201 = vpop.f32.mrf.mxu0
    %v202 = vadd.f32 0.0, %v201
    %v203 = vpop.f32.mrf.mxu0
    %204 = vdwg.mxu0
    %v205 = vld [vmem:[%s2] sm:$0xf]
    %v207 = vrot.slane %v205, 1
    %v208 = vrot.slane %v205, 2
    %v209 = vrot.slane %v205, 3
    %v210 = vperm.slane %v205, 0
    %v211 = vperm.slane %v207, 0
    %v212 = vperm.slane %v208, 0
    %v213 = vperm.slane %v209, 0
    %v218 = vadd.f32 %v72, %v210
    %v219 = vadd.f32 %v88, %v210
    %v220 = vadd.f32 %v113, %v211
    %v221 = vadd.f32 %v126, %v211
    %v222 = vadd.f32 %v151, %v212
    %v223 = vadd.f32 %v164, %v212
    %v224 = vadd.f32 %v189, %v213
    %v225 = vadd.f32 %v202, %v213
    %v226 = vpack.c.bf16 %v218, %v218
    %v227 = vpack.c.bf16 %v219, %v219
    %v228 = vpack.c.bf16 %v220, %v220
    %v229 = vpack.c.bf16 %v221, %v221
    %v230 = vpack.c.bf16 %v222, %v222
    %v231 = vpack.c.bf16 %v223, %v223
    %v232 = vpack.c.bf16 %v224, %v224
    %v233 = vpack.c.bf16 %v225, %v225
    %v235 = vunpack.c.l.b16 %v226
    %v236 = vpack.c.b16 %v235, %v235
    %237 = vrot.lane.b32.xlu0 %v236, 120
    %v238 = vpop.permute.xlu0 %237
    %vm239 = vcmask 64512
    %v241 = vsel %vm239, %v226, 0
    %v244 = vsel %vm239, %v238, 0
    %246 = vmatpush.bf16.xpose.msra.mxu0 0
    %247 = vmatpush.bf16.xpose.msra.mxu0 0
    %248 = vmatpush.bf16.xpose.msra.mxu0 0
    %249 = vmatpush.bf16.xpose.msra.mxu0 0
    %250 = vmatpush.bf16.xpose.msra.mxu0 0
    %251 = vmatpush.bf16.xpose.msra.mxu0 0
    %252 = vmatpush.bf16.xpose.msra.mxu0 0
    %253 = vmatpush.bf16.xpose.msra.mxu0 %v244
    %254 = vmatmul.bf16.gmra.mxu0 %v241
    %v255 = vpop.f32.mrf.mxu0
    %v256 = vadd.f32 0.0, %v255
    %v257 = vpop.f32.mrf.mxu0
    %258 = vdwg.mxu0
    %v260 = vunpack.c.l.b16 %v227
    %v261 = vpack.c.b16 %v260, %v260
    %262 = vrot.lane.b32.xlu0 %v261, 120
    %v263 = vpop.permute.xlu0 %262
    %v265 = vsel %vm239, %v227, 0
    %v268 = vsel %vm239, %v263, 0
    %270 = vmatpush.bf16.xpose.msra.mxu0 0
    %271 = vmatpush.bf16.xpose.msra.mxu0 0
    %272 = vmatpush.bf16.xpose.msra.mxu0 0
    %273 = vmatpush.bf16.xpose.msra.mxu0 0
    %274 = vmatpush.bf16.xpose.msra.mxu0 0
    %275 = vmatpush.bf16.xpose.msra.mxu0 0
    %276 = vmatpush.bf16.xpose.msra.mxu0 0
    %277 = vmatpush.bf16.xpose.msra.mxu0 %v268
    %278 = vmatmul.bf16.gmra.mxu0 %v265
    %v279 = vpop.f32.mrf.mxu0
    %v280 = vadd.f32 0.0, %v279
    %v281 = vpop.f32.mrf.mxu0
    %282 = vdwg.mxu0
    %v284 = vunpack.c.l.b16 %v228
    %v285 = vpack.c.b16 %v284, %v284
    %286 = vrot.lane.b32.xlu0 %v285, 120
    %v287 = vpop.permute.xlu0 %286
    %v289 = vsel %vm239, %v228, 0
    %v292 = vsel %vm239, %v287, 0
    %294 = vmatpush.bf16.xpose.msra.mxu0 0
    %295 = vmatpush.bf16.xpose.msra.mxu0 0
    %296 = vmatpush.bf16.xpose.msra.mxu0 0
    %297 = vmatpush.bf16.xpose.msra.mxu0 0
    %298 = vmatpush.bf16.xpose.msra.mxu0 0
    %299 = vmatpush.bf16.xpose.msra.mxu0 0
    %300 = vmatpush.bf16.xpose.msra.mxu0 0
    %301 = vmatpush.bf16.xpose.msra.mxu0 %v292
    %302 = vmatmul.bf16.gmra.mxu0 %v289
    %v303 = vpop.f32.mrf.mxu0
    %v304 = vadd.f32 0.0, %v303
    %v305 = vpop.f32.mrf.mxu0
    %306 = vdwg.mxu0
    %v308 = vunpack.c.l.b16 %v229
    %v309 = vpack.c.b16 %v308, %v308
    %310 = vrot.lane.b32.xlu0 %v309, 120
    %v311 = vpop.permute.xlu0 %310
    %v313 = vsel %vm239, %v229, 0
    %v316 = vsel %vm239, %v311, 0
    %318 = vmatpush.bf16.xpose.msra.mxu0 0
    %319 = vmatpush.bf16.xpose.msra.mxu0 0
    %320 = vmatpush.bf16.xpose.msra.mxu0 0
    %321 = vmatpush.bf16.xpose.msra.mxu0 0
    %322 = vmatpush.bf16.xpose.msra.mxu0 0
    %323 = vmatpush.bf16.xpose.msra.mxu0 0
    %324 = vmatpush.bf16.xpose.msra.mxu0 0
    %325 = vmatpush.bf16.xpose.msra.mxu0 %v316
    %326 = vmatmul.bf16.gmra.mxu0 %v313
    %v327 = vpop.f32.mrf.mxu0
    %v328 = vadd.f32 0.0, %v327
    %v329 = vpop.f32.mrf.mxu0
    %330 = vdwg.mxu0
    %v332 = vunpack.c.l.b16 %v230
    %v333 = vpack.c.b16 %v332, %v332
    %334 = vrot.lane.b32.xlu0 %v333, 120
    %v335 = vpop.permute.xlu0 %334
    %v337 = vsel %vm239, %v230, 0
    %v340 = vsel %vm239, %v335, 0
    %342 = vmatpush.bf16.xpose.msra.mxu0 0
    %343 = vmatpush.bf16.xpose.msra.mxu0 0
    %344 = vmatpush.bf16.xpose.msra.mxu0 0
    %345 = vmatpush.bf16.xpose.msra.mxu0 0
    %346 = vmatpush.bf16.xpose.msra.mxu0 0
    %347 = vmatpush.bf16.xpose.msra.mxu0 0
    %348 = vmatpush.bf16.xpose.msra.mxu0 0
    %349 = vmatpush.bf16.xpose.msra.mxu0 %v340
    %350 = vmatmul.bf16.gmra.mxu0 %v337
    %v351 = vpop.f32.mrf.mxu0
    %v352 = vadd.f32 0.0, %v351
    %v353 = vpop.f32.mrf.mxu0
    %354 = vdwg.mxu0
    %v356 = vunpack.c.l.b16 %v231
    %v357 = vpack.c.b16 %v356, %v356
    %358 = vrot.lane.b32.xlu0 %v357, 120
    %v359 = vpop.permute.xlu0 %358
    %v361 = vsel %vm239, %v231, 0
    %v364 = vsel %vm239, %v359, 0
    %366 = vmatpush.bf16.xpose.msra.mxu0 0
    %367 = vmatpush.bf16.xpose.msra.mxu0 0
    %368 = vmatpush.bf16.xpose.msra.mxu0 0
    %369 = vmatpush.bf16.xpose.msra.mxu0 0
    %370 = vmatpush.bf16.xpose.msra.mxu0 0
    %371 = vmatpush.bf16.xpose.msra.mxu0 0
    %372 = vmatpush.bf16.xpose.msra.mxu0 0
    %373 = vmatpush.bf16.xpose.msra.mxu0 %v364
    %374 = vmatmul.bf16.gmra.mxu0 %v361
    %v375 = vpop.f32.mrf.mxu0
    %v376 = vadd.f32 0.0, %v375
    %v377 = vpop.f32.mrf.mxu0
    %378 = vdwg.mxu0
    %v380 = vunpack.c.l.b16 %v232
    %v381 = vpack.c.b16 %v380, %v380
    %382 = vrot.lane.b32.xlu0 %v381, 120
    %v383 = vpop.permute.xlu0 %382
    %v385 = vsel %vm239, %v232, 0
    %v388 = vsel %vm239, %v383, 0
    %390 = vmatpush.bf16.xpose.msra.mxu0 0
    %391 = vmatpush.bf16.xpose.msra.mxu0 0
    %392 = vmatpush.bf16.xpose.msra.mxu0 0
    %393 = vmatpush.bf16.xpose.msra.mxu0 0
    %394 = vmatpush.bf16.xpose.msra.mxu0 0
    %395 = vmatpush.bf16.xpose.msra.mxu0 0
    %396 = vmatpush.bf16.xpose.msra.mxu0 0
    %397 = vmatpush.bf16.xpose.msra.mxu0 %v388
    %398 = vmatmul.bf16.gmra.mxu0 %v385
    %v399 = vpop.f32.mrf.mxu0
    %v400 = vadd.f32 0.0, %v399
    %v401 = vpop.f32.mrf.mxu0
    %402 = vdwg.mxu0
    %v404 = vunpack.c.l.b16 %v233
    %v405 = vpack.c.b16 %v404, %v404
    %406 = vrot.lane.b32.xlu0 %v405, 120
    %v407 = vpop.permute.xlu0 %406
    %v409 = vsel %vm239, %v233, 0
    %v412 = vsel %vm239, %v407, 0
    %414 = vmatpush.bf16.xpose.msra.mxu0 0
    %415 = vmatpush.bf16.xpose.msra.mxu0 0
    %416 = vmatpush.bf16.xpose.msra.mxu0 0
    %417 = vmatpush.bf16.xpose.msra.mxu0 0
    %418 = vmatpush.bf16.xpose.msra.mxu0 0
    %419 = vmatpush.bf16.xpose.msra.mxu0 0
    %420 = vmatpush.bf16.xpose.msra.mxu0 0
    %421 = vmatpush.bf16.xpose.msra.mxu0 %v412
    %422 = vmatmul.bf16.gmra.mxu0 %v409
    %v423 = vpop.f32.mrf.mxu0
    %v424 = vadd.f32 0.0, %v423
    %v425 = vpop.f32.mrf.mxu0
    %426 = vdwg.mxu0
    %v427 = vmul.f32 %v256, 0.35355338
    %v428 = vmul.f32 %v280, 0.35355338
    %v429 = vmul.f32 %v304, 0.35355338
    %v430 = vmul.f32 %v328, 0.35355338
    %v431 = vmul.f32 %v352, 0.35355338
    %v432 = vmul.f32 %v376, 0.35355338
    %v433 = vmul.f32 %v400, 0.35355338
    %v434 = vmul.f32 %v424, 0.35355338
    %v435 = vsel %vm239, %v427, -inf
    %436 = vmax.xlane.f32.xlu0 %v435
    %v437 = vpop.xlane.xlu0 %436
    %v438 = vsel %vm239, %v428, -inf
    %439 = vmax.xlane.f32.xlu0 %v438
    %v440 = vpop.xlane.xlu0 %439
    %v441 = vsel %vm239, %v429, -inf
    %442 = vmax.xlane.f32.xlu0 %v441
    %v443 = vpop.xlane.xlu0 %442
    %v444 = vsel %vm239, %v430, -inf
    %445 = vmax.xlane.f32.xlu0 %v444
    %v446 = vpop.xlane.xlu0 %445
    %v447 = vsel %vm239, %v431, -inf
    %448 = vmax.xlane.f32.xlu0 %v447
    %v449 = vpop.xlane.xlu0 %448
    %v450 = vsel %vm239, %v432, -inf
    %451 = vmax.xlane.f32.xlu0 %v450
    %v452 = vpop.xlane.xlu0 %451
    %v453 = vsel %vm239, %v433, -inf
    %454 = vmax.xlane.f32.xlu0 %v453
    %v455 = vpop.xlane.xlu0 %454
    %v456 = vsel %vm239, %v434, -inf
    %457 = vmax.xlane.f32.xlu0 %v456
    %v458 = vpop.xlane.xlu0 %457
    %v459 = vsub.f32 %v427, %v437
    %v460 = vsub.f32 %v428, %v440
    %v461 = vsub.f32 %v429, %v443
    %v462 = vsub.f32 %v430, %v446
    %v463 = vsub.f32 %v431, %v449
    %v464 = vsub.f32 %v432, %v452
    %v465 = vsub.f32 %v433, %v455
    %v466 = vsub.f32 %v434, %v458
    %v467 = vmul.f32 %v459, 1.442695
    %v468 = vpow.pop %v467
    %v469 = vmul.f32 %v460, 1.442695
    %v470 = vpow.pop %v469
    %v471 = vmul.f32 %v461, 1.442695
    %v472 = vpow.pop %v471
    %v473 = vmul.f32 %v462, 1.442695
    %v474 = vpow.pop %v473
    %v475 = vmul.f32 %v463, 1.442695
    %v476 = vpow.pop %v475
    %v477 = vmul.f32 %v464, 1.442695
    %v478 = vpow.pop %v477
    %v479 = vmul.f32 %v465, 1.442695
    %v480 = vpow.pop %v479
    %v481 = vmul.f32 %v466, 1.442695
    %v482 = vpow.pop %v481
    %v483 = vsel %vm239, %v468, 0.0
    %484 = vadd.xlane.f32.xlu0 %v483
    %v485 = vpop.xlane.xlu0 %484
    %v486 = vsel %vm239, %v470, 0.0
    %487 = vadd.xlane.f32.xlu0 %v486
    %v488 = vpop.xlane.xlu0 %487
    %v489 = vsel %vm239, %v472, 0.0
    %490 = vadd.xlane.f32.xlu0 %v489
    %v491 = vpop.xlane.xlu0 %490
    %v492 = vsel %vm239, %v474, 0.0
    %493 = vadd.xlane.f32.xlu0 %v492
    %v494 = vpop.xlane.xlu0 %493
    %v495 = vsel %vm239, %v476, 0.0
    %496 = vadd.xlane.f32.xlu0 %v495
    %v497 = vpop.xlane.xlu0 %496
    %v498 = vsel %vm239, %v478, 0.0
    %499 = vadd.xlane.f32.xlu0 %v498
    %v500 = vpop.xlane.xlu0 %499
    %v501 = vsel %vm239, %v480, 0.0
    %502 = vadd.xlane.f32.xlu0 %v501
    %v503 = vpop.xlane.xlu0 %502
    %v504 = vsel %vm239, %v482, 0.0
    %505 = vadd.xlane.f32.xlu0 %v504
    %v506 = vpop.xlane.xlu0 %505
    %v507 = vrcp.pop %v485
    %v508 = vrcp.pop %v488
    %v509 = vrcp.pop %v491
    %v510 = vrcp.pop %v494
    %v511 = vrcp.pop %v497
    %v512 = vrcp.pop %v500
    %v513 = vrcp.pop %v503
    %v514 = vrcp.pop %v506
    %v515 = vmul.f32 %v468, %v507
    %v516 = vmul.f32 %v470, %v508
    %v517 = vmul.f32 %v472, %v509
    %v518 = vmul.f32 %v474, %v510
    %v519 = vmul.f32 %v476, %v511
    %v520 = vmul.f32 %v478, %v512
    %v521 = vmul.f32 %v480, %v513
    %v522 = vmul.f32 %v482, %v514
    %v523 = vpack.c.bf16 %v515, %v515
    %v524 = vpack.c.bf16 %v516, %v516
    %v525 = vpack.c.bf16 %v517, %v517
    %v526 = vpack.c.bf16 %v518, %v518
    %v527 = vpack.c.bf16 %v519, %v519
    %v528 = vpack.c.bf16 %v520, %v520
    %v529 = vpack.c.bf16 %v521, %v521
    %v530 = vpack.c.bf16 %v522, %v522
    %531 = vrot.lane.b32.xlu0 %v236, 112
    %v532 = vpop.permute.xlu0 %531
    %v534 = vsel %vm239, %v523, 0
    %vm536 = vcmask 1043456
    %v538 = vsel %vm536, %v532, 0
    %540 = vmatpush.bf16.msra.mxu0 0
    %541 = vmatpush.bf16.msra.mxu0 0
    %542 = vmatpush.bf16.msra.mxu0 0
    %543 = vmatpush.bf16.msra.mxu0 0
    %544 = vmatpush.bf16.msra.mxu0 0
    %545 = vmatpush.bf16.msra.mxu0 0
    %546 = vmatpush.bf16.msra.mxu0 0
    %547 = vmatpush.bf16.msra.mxu0 %v538
    %548 = vmatmul.bf16.gmra.mxu0 %v534
    %v549 = vpop.f32.mrf.mxu0
    %v550 = vadd.f32 0.0, %v549
    %v551 = vpop.f32.mrf.mxu0
    %552 = vdwg.mxu0
    %553 = vrot.lane.b32.xlu0 %v261, 112
    %v554 = vpop.permute.xlu0 %553
    %v556 = vsel %vm239, %v524, 0
    %v559 = vsel %vm536, %v554, 0
    %561 = vmatpush.bf16.msra.mxu0 0
    %562 = vmatpush.bf16.msra.mxu0 0
    %563 = vmatpush.bf16.msra.mxu0 0
    %564 = vmatpush.bf16.msra.mxu0 0
    %565 = vmatpush.bf16.msra.mxu0 0
    %566 = vmatpush.bf16.msra.mxu0 0
    %567 = vmatpush.bf16.msra.mxu0 0
    %568 = vmatpush.bf16.msra.mxu0 %v559
    %569 = vmatmul.bf16.gmra.mxu0 %v556
    %v570 = vpop.f32.mrf.mxu0
    %v571 = vadd.f32 0.0, %v570
    %v572 = vpop.f32.mrf.mxu0
    %573 = vdwg.mxu0
    %574 = vrot.lane.b32.xlu0 %v285, 112
    %v575 = vpop.permute.xlu0 %574
    %v577 = vsel %vm239, %v525, 0
    %v580 = vsel %vm536, %v575, 0
    %582 = vmatpush.bf16.msra.mxu0 0
    %583 = vmatpush.bf16.msra.mxu0 0
    %584 = vmatpush.bf16.msra.mxu0 0
    %585 = vmatpush.bf16.msra.mxu0 0
    %586 = vmatpush.bf16.msra.mxu0 0
    %587 = vmatpush.bf16.msra.mxu0 0
    %588 = vmatpush.bf16.msra.mxu0 0
    %589 = vmatpush.bf16.msra.mxu0 %v580
    %590 = vmatmul.bf16.gmra.mxu0 %v577
    %v591 = vpop.f32.mrf.mxu0
    %v592 = vadd.f32 0.0, %v591
    %v593 = vpop.f32.mrf.mxu0
    %594 = vdwg.mxu0
    %595 = vrot.lane.b32.xlu0 %v309, 112
    %v596 = vpop.permute.xlu0 %595
    %v598 = vsel %vm239, %v526, 0
    %v601 = vsel %vm536, %v596, 0
    %603 = vmatpush.bf16.msra.mxu0 0
    %604 = vmatpush.bf16.msra.mxu0 0
    %605 = vmatpush.bf16.msra.mxu0 0
    %606 = vmatpush.bf16.msra.mxu0 0
    %607 = vmatpush.bf16.msra.mxu0 0
    %608 = vmatpush.bf16.msra.mxu0 0
    %609 = vmatpush.bf16.msra.mxu0 0
    %610 = vmatpush.bf16.msra.mxu0 %v601
    %611 = vmatmul.bf16.gmra.mxu0 %v598
    %v612 = vpop.f32.mrf.mxu0
    %v613 = vadd.f32 0.0, %v612
    %v614 = vpop.f32.mrf.mxu0
    %615 = vdwg.mxu0
    %616 = vrot.lane.b32.xlu0 %v333, 112
    %v617 = vpop.permute.xlu0 %616
    %v619 = vsel %vm239, %v527, 0
    %v622 = vsel %vm536, %v617, 0
    %624 = vmatpush.bf16.msra.mxu0 0
    %625 = vmatpush.bf16.msra.mxu0 0
    %626 = vmatpush.bf16.msra.mxu0 0
    %627 = vmatpush.bf16.msra.mxu0 0
    %628 = vmatpush.bf16.msra.mxu0 0
    %629 = vmatpush.bf16.msra.mxu0 0
    %630 = vmatpush.bf16.msra.mxu0 0
    %631 = vmatpush.bf16.msra.mxu0 %v622
    %632 = vmatmul.bf16.gmra.mxu0 %v619
    %v633 = vpop.f32.mrf.mxu0
    %v634 = vadd.f32 0.0, %v633
    %v635 = vpop.f32.mrf.mxu0
    %636 = vdwg.mxu0
    %637 = vrot.lane.b32.xlu0 %v357, 112
    %v638 = vpop.permute.xlu0 %637
    %v640 = vsel %vm239, %v528, 0
    %v643 = vsel %vm536, %v638, 0
    %645 = vmatpush.bf16.msra.mxu0 0
    %646 = vmatpush.bf16.msra.mxu0 0
    %647 = vmatpush.bf16.msra.mxu0 0
    %648 = vmatpush.bf16.msra.mxu0 0
    %649 = vmatpush.bf16.msra.mxu0 0
    %650 = vmatpush.bf16.msra.mxu0 0
    %651 = vmatpush.bf16.msra.mxu0 0
    %652 = vmatpush.bf16.msra.mxu0 %v643
    %653 = vmatmul.bf16.gmra.mxu0 %v640
    %v654 = vpop.f32.mrf.mxu0
    %v655 = vadd.f32 0.0, %v654
    %v656 = vpop.f32.mrf.mxu0
    %657 = vdwg.mxu0
    %658 = vrot.lane.b32.xlu0 %v381, 112
    %v659 = vpop.permute.xlu0 %658
    %v661 = vsel %vm239, %v529, 0
    %v664 = vsel %vm536, %v659, 0
    %666 = vmatpush.bf16.msra.mxu0 0
    %667 = vmatpush.bf16.msra.mxu0 0
    %668 = vmatpush.bf16.msra.mxu0 0
    %669 = vmatpush.bf16.msra.mxu0 0
    %670 = vmatpush.bf16.msra.mxu0 0
    %671 = vmatpush.bf16.msra.mxu0 0
    %672 = vmatpush.bf16.msra.mxu0 0
    %673 = vmatpush.bf16.msra.mxu0 %v664
    %674 = vmatmul.bf16.gmra.mxu0 %v661
    %v675 = vpop.f32.mrf.mxu0
    %v676 = vadd.f32 0.0, %v675
    %v677 = vpop.f32.mrf.mxu0
    %678 = vdwg.mxu0
    %679 = vrot.lane.b32.xlu0 %v405, 112
    %v680 = vpop.permute.xlu0 %679
    %v682 = vsel %vm239, %v530, 0
    %v685 = vsel %vm536, %v680, 0
    %687 = vmatpush.bf16.msra.mxu0 0
    %688 = vmatpush.bf16.msra.mxu0 0
    %689 = vmatpush.bf16.msra.mxu0 0
    %690 = vmatpush.bf16.msra.mxu0 0
    %691 = vmatpush.bf16.msra.mxu0 0
    %692 = vmatpush.bf16.msra.mxu0 0
    %693 = vmatpush.bf16.msra.mxu0 0
    %694 = vmatpush.bf16.msra.mxu0 %v685
    %695 = vmatmul.bf16.gmra.mxu0 %v682
    %v696 = vpop.f32.mrf.mxu0
    %v697 = vadd.f32 0.0, %v696
    %v698 = vpop.f32.mrf.mxu0
    %699 = vdwg.mxu0
    %v700 = vld [vmem:[%s3] sm:$0xf]
    %v701 = vld [vmem:[%s3 + $0x4] sm:$0xf]
    %v702 = vld [vmem:[%s3 + $0x8] sm:$0xf]
    %v703 = vld [vmem:[%s3 + $0xc] sm:$0xf]
    %v704 = vpack.c.bf16 %v550, %v550
    %v705 = vpack.c.bf16 %v571, %v571
    %v706 = vpack.c.bf16 %v592, %v592
    %v707 = vpack.c.bf16 %v613, %v613
    %v708 = vpack.c.bf16 %v634, %v634
    %v709 = vpack.c.bf16 %v655, %v655
    %v710 = vpack.c.bf16 %v676, %v676
    %v711 = vpack.c.bf16 %v697, %v697
    %v713 = vsel %vm239, %v704, 0
    %v716 = vsel %vm536, %v700, 0
    %718 = vmatpush.bf16.msra.mxu0 0
    %719 = vmatpush.bf16.msra.mxu0 0
    %720 = vmatpush.bf16.msra.mxu0 0
    %721 = vmatpush.bf16.msra.mxu0 0
    %722 = vmatpush.bf16.msra.mxu0 0
    %723 = vmatpush.bf16.msra.mxu0 0
    %724 = vmatpush.bf16.msra.mxu0 0
    %725 = vmatpush.bf16.msra.mxu0 %v716
    %726 = vmatmul.bf16.gmra.mxu0 %v713
    %v727 = vpop.f32.mrf.mxu0
    %v728 = vadd.f32 0.0, %v727
    %v729 = vpop.f32.mrf.mxu0
    %730 = vdwg.mxu0
    %v732 = vsel %vm239, %v705, 0
    %734 = vmatpush.bf16.msra.mxu0 0
    %735 = vmatpush.bf16.msra.mxu0 0
    %736 = vmatpush.bf16.msra.mxu0 0
    %737 = vmatpush.bf16.msra.mxu0 0
    %738 = vmatpush.bf16.msra.mxu0 0
    %739 = vmatpush.bf16.msra.mxu0 0
    %740 = vmatpush.bf16.msra.mxu0 0
    %741 = vmatpush.bf16.msra.mxu0 %v716
    %742 = vmatmul.bf16.gmra.mxu0 %v732
    %v743 = vpop.f32.mrf.mxu0
    %v744 = vadd.f32 0.0, %v743
    %v745 = vpop.f32.mrf.mxu0
    %746 = vdwg.mxu0
    %v748 = vsel %vm239, %v706, 0
    %v751 = vsel %vm536, %v701, 0
    %753 = vmatpush.bf16.msra.mxu0 0
    %754 = vmatpush.bf16.msra.mxu0 0
    %755 = vmatpush.bf16.msra.mxu0 0
    %756 = vmatpush.bf16.msra.mxu0 0
    %757 = vmatpush.bf16.msra.mxu0 0
    %758 = vmatpush.bf16.msra.mxu0 0
    %759 = vmatpush.bf16.msra.mxu0 0
    %760 = vmatpush.bf16.msra.mxu0 %v751
    %761 = vmatmul.bf16.gmra.mxu0 %v748
    %v762 = vpop.f32.mrf.mxu0
    %v763 = vadd.f32 0.0, %v762
    %v764 = vpop.f32.mrf.mxu0
    %765 = vdwg.mxu0
    %v767 = vsel %vm239, %v707, 0
    %769 = vmatpush.bf16.msra.mxu0 0
    %770 = vmatpush.bf16.msra.mxu0 0
    %771 = vmatpush.bf16.msra.mxu0 0
    %772 = vmatpush.bf16.msra.mxu0 0
    %773 = vmatpush.bf16.msra.mxu0 0
    %774 = vmatpush.bf16.msra.mxu0 0
    %775 = vmatpush.bf16.msra.mxu0 0
    %776 = vmatpush.bf16.msra.mxu0 %v751
    %777 = vmatmul.bf16.gmra.mxu0 %v767
    %v778 = vpop.f32.mrf.mxu0
    %v779 = vadd.f32 0.0, %v778
    %v780 = vpop.f32.mrf.mxu0
    %781 = vdwg.mxu0
    %v783 = vsel %vm239, %v708, 0
    %v786 = vsel %vm536, %v702, 0
    %788 = vmatpush.bf16.msra.mxu0 0
    %789 = vmatpush.bf16.msra.mxu0 0
    %790 = vmatpush.bf16.msra.mxu0 0
    %791 = vmatpush.bf16.msra.mxu0 0
    %792 = vmatpush.bf16.msra.mxu0 0
    %793 = vmatpush.bf16.msra.mxu0 0
    %794 = vmatpush.bf16.msra.mxu0 0
    %795 = vmatpush.bf16.msra.mxu0 %v786
    %796 = vmatmul.bf16.gmra.mxu0 %v783
    %v797 = vpop.f32.mrf.mxu0
    %v798 = vadd.f32 0.0, %v797
    %v799 = vpop.f32.mrf.mxu0
    %800 = vdwg.mxu0
    %v802 = vsel %vm239, %v709, 0
    %804 = vmatpush.bf16.msra.mxu0 0
    %805 = vmatpush.bf16.msra.mxu0 0
    %806 = vmatpush.bf16.msra.mxu0 0
    %807 = vmatpush.bf16.msra.mxu0 0
    %808 = vmatpush.bf16.msra.mxu0 0
    %809 = vmatpush.bf16.msra.mxu0 0
    %810 = vmatpush.bf16.msra.mxu0 0
    %811 = vmatpush.bf16.msra.mxu0 %v786
    %812 = vmatmul.bf16.gmra.mxu0 %v802
    %v813 = vpop.f32.mrf.mxu0
    %v814 = vadd.f32 0.0, %v813
    %v815 = vpop.f32.mrf.mxu0
    %816 = vdwg.mxu0
    %v818 = vsel %vm239, %v710, 0
    %v821 = vsel %vm536, %v703, 0
    %823 = vmatpush.bf16.msra.mxu0 0
    %824 = vmatpush.bf16.msra.mxu0 0
    %825 = vmatpush.bf16.msra.mxu0 0
    %826 = vmatpush.bf16.msra.mxu0 0
    %827 = vmatpush.bf16.msra.mxu0 0
    %828 = vmatpush.bf16.msra.mxu0 0
    %829 = vmatpush.bf16.msra.mxu0 0
    %830 = vmatpush.bf16.msra.mxu0 %v821
    %831 = vmatmul.bf16.gmra.mxu0 %v818
    %v832 = vpop.f32.mrf.mxu0
    %v833 = vadd.f32 0.0, %v832
    %v834 = vpop.f32.mrf.mxu0
    %835 = vdwg.mxu0
    %v837 = vsel %vm239, %v711, 0
    %839 = vmatpush.bf16.msra.mxu0 0
    %840 = vmatpush.bf16.msra.mxu0 0
    %841 = vmatpush.bf16.msra.mxu0 0
    %842 = vmatpush.bf16.msra.mxu0 0
    %843 = vmatpush.bf16.msra.mxu0 0
    %844 = vmatpush.bf16.msra.mxu0 0
    %845 = vmatpush.bf16.msra.mxu0 0
    %846 = vmatpush.bf16.msra.mxu0 %v821
    %847 = vmatmul.bf16.gmra.mxu0 %v837
    %v848 = vpop.f32.mrf.mxu0
    %v849 = vadd.f32 0.0, %v848
    %v850 = vpop.f32.mrf.mxu0
    %851 = vdwg.mxu0
    %v852 = vadd.f32 %v728, %v763
    %v853 = vadd.f32 %v744, %v779
    %v854 = vadd.f32 %v852, %v798
    %v855 = vadd.f32 %v853, %v814
    %v856 = vadd.f32 %v854, %v833
    %v857 = vadd.f32 %v855, %v849
    %v858 = vld [vmem:[%s4] sm:$0x1]
    %v860 = vperm.slane %v858, 0
    %v862 = vadd.f32 %v856, %v860
    %v863 = vadd.f32 %v857, %v860
    %v864 = vunpack.c.l.bf16 %v28
    %v865 = vunpack.c.l.bf16 %v29
    %v866 = vadd.f32 %v864, %v862
    %v867 = vadd.f32 %v865, %v863
    %v868 = vmul.f32 %v866, %v866
    %v869 = vmul.f32 %v867, %v867
    %v870 = vsel %vm58, %v868, 0.0
    %871 = vadd.xlane.f32.xlu0 %v870
    %v872 = vpop.xlane.xlu0 %871
    %v873 = vsel %vm58, %v869, 0.0
    %874 = vadd.xlane.f32.xlu0 %v873
    %v875 = vpop.xlane.xlu0 %874
    %v876 = vmax.f32 %v872, 1e-24
    %v877 = vmax.f32 %v875, 1e-24
    %v878 = vrsqrt.pop %v876
    %v879 = vmul.f32 %v878, %v876
    %v880 = vmul.f32 %v879, %v878
    %v881 = vmul.f32 0.5, %v880
    %v882 = vsub.f32 1.5, %v881
    %v883 = vmul.f32 %v878, %v882
    %vm884 = vweird.f32 %v876
    %vm885 = vweird.f32 %v878
    %vm886 = vmor %vm884, %vm885
    %v887 = vsel %vm886, %v878, %v883
    %v888 = vrsqrt.pop %v877
    %v889 = vmul.f32 %v888, %v877
    %v890 = vmul.f32 %v889, %v888
    %v891 = vmul.f32 0.5, %v890
    %v892 = vsub.f32 1.5, %v891
    %v893 = vmul.f32 %v888, %v892
    %vm894 = vweird.f32 %v877
    %vm895 = vweird.f32 %v888
    %vm896 = vmor %vm894, %vm895
    %v897 = vsel %vm896, %v888, %v893
    %v898 = vmul.f32 %v866, %v887
    %v899 = vmul.f32 %v867, %v897
    %v900 = vpack.c.bf16 %v899, %v898
    %v901 = vld [vmem:[%s5] sm:$0xf]
    %v902 = vld [vmem:[%s5 + $0x4] sm:$0xf]
    %v903 = vld [vmem:[%s5 + $0x8] sm:$0xf]
    %v904 = vld [vmem:[%s5 + $0xc] sm:$0xf]
    %v905 = vld [vmem:[%s6] sm:$0x1]
    %v907 = vperm.slane %v905, 0
    %v913 = vunpack.c.l.b16 %v901
    %v914 = vunpack.c.l.b16 %v902
    %v915 = vunpack.c.l.b16 %v903
    %v916 = vunpack.c.l.b16 %v904
    %v917 = vpack.c.b16 %v914, %v913
    %v918 = vpack.c.b16 %v916, %v915
    %v922 = vsel %vm58, %v900, 0
    %924 = vmatpush.bf16.msra.mxu0 0
    %925 = vmatpush.bf16.msra.mxu0 0
    %926 = vmatpush.bf16.msra.mxu0 0
    %927 = vmatpush.bf16.msra.mxu0 0
    %928 = vmatpush.bf16.msra.mxu0 0
    %929 = vmatpush.bf16.msra.mxu0 0
    %930 = vmatpush.bf16.msra.mxu0 %v918
    %931 = vmatpush.bf16.msra.mxu0 %v917
    %932 = vmatmul.bf16.gmra.mxu0 %v922
    %v933 = vpop.f32.mrf.mxu0
    %v934 = vadd.f32 %v907, %v933
    %v935 = vpop.f32.mrf.mxu0
    %v936 = vadd.f32 %v907, %v935
    %937 = vdwg.mxu0
    %v938 = vmul.f32 %v934, %v934
    %v939 = vmul.f32 %v936, %v936
    %v940 = vsel %vm58, %v938, 0.0
    %941 = vadd.xlane.f32.xlu0 %v940
    %v942 = vpop.xlane.xlu0 %941
    %v943 = vsel %vm58, %v939, 0.0
    %944 = vadd.xlane.f32.xlu0 %v943
    %v945 = vpop.xlane.xlu0 %944
    %v946 = vmax.f32 %v942, 2.5e-25
    %v947 = vmax.f32 %v945, 2.5e-25
    %v948 = vrsqrt.pop %v946
    %v949 = vmul.f32 %v948, %v946
    %v950 = vmul.f32 %v949, %v948
    %v951 = vmul.f32 0.5, %v950
    %v952 = vsub.f32 1.5, %v951
    %v953 = vmul.f32 %v948, %v952
    %vm954 = vweird.f32 %v946
    %vm955 = vweird.f32 %v948
    %vm956 = vmor %vm954, %vm955
    %v957 = vsel %vm956, %v948, %v953
    %v958 = vrsqrt.pop %v947
    %v959 = vmul.f32 %v958, %v947
    %v960 = vmul.f32 %v959, %v958
    %v961 = vmul.f32 0.5, %v960
    %v962 = vsub.f32 1.5, %v961
    %v963 = vmul.f32 %v958, %v962
    %vm964 = vweird.f32 %v947
    %vm965 = vweird.f32 %v958
    %vm966 = vmor %vm964, %vm965
    %v967 = vsel %vm966, %v958, %v963
    %v968 = vmul.f32 %v934, %v957
    %v969 = vmul.f32 %v936, %v967
    %970 = vst.msk [vmem:[#allocation2] sm:$0xff] %vm58, %v968
    %971 = vst.msk [vmem:[#allocation2 + $0x8] sm:$0xff] %vm58, %v969
    // Predicated region
    $region30: #{tpu_custom_call.1} parent=1 // pred_check
      _
    $region31: #{tpu_custom_call.1} parent=1 // pred_check_branch
      %973 = sbr.rel (0) target = $region33
    $region32: #{tpu_custom_call.1} parent=1 // pred_region
      %975 = vsyncadd [#allocation3], 0
      %s976 = sshll.u32 [#allocation2], 4
      %s977 = int_to_ptr.vmem [resolvable:$true] %s976
      %s978 = sshll.u32 %s7, 4
      %s979 = int_to_ptr.hbm [resolvable:$true] %s978
      %984 = dma.vmem_to_hbm [thread:$0]  %s977, 256, %s979, [#allocation3], 128, 128, 8
    $region33: #{tpu_custom_call.1} parent=1 // pred_fallthru
      _
    // Predicated region
    $region34: #{tpu_custom_call.1} parent=1 // pred_check
      _
    $region35: #{tpu_custom_call.1} parent=1 // pred_check_branch
      %986 = sbr.rel (0) target = $region37
    $region36: #{tpu_custom_call.1} parent=1 // pred_region
      %988 = dma.done [#allocation3], 256
    $region37: #{tpu_custom_call.1} parent=1 // pred_fallthru
      _
    %989 = vsyncpa [#allocation3], 1

</llo_original>
